<compile_context>
chip_gen: v7x
topology: tpu7x:2x2x1
jax: 0.10.0
libtpu: 0.0.40
codegen_flags: <defaults>
</compile_context>

<pallas_src>
import functools

import jax
import jax.numpy as jnp
from jax.experimental import pallas as pl
from jax.experimental.pallas import tpu as pltpu

LANES = 128
TM_MAX = 8192          # rows per block: 8192*128*4B = 4 MiB per f32 input block
VMEM_LIMIT = 32 * 1024 * 1024   # covers 2 inputs x 2 bufs x 4 MiB (+output) everywhere


def _is_v7x():
    try:
        kind = jax.devices()[0].device_kind.lower()
        return ("v7" in kind) or ("7x" in kind)
    except Exception:
        return False


def _kl_kernel(mu_ref, sigma_ref, out_ref, *, n_valid, tm, steps, acc_rows,
               full_blocks, apply_mask):
    """Accumulates partial sums of (mu^2 + sigma^2 - log(sigma^2)) into a resident
    (acc_rows, 128) f32 tile (one tile per core split).  The '-1' and the final
    cross-lane reduce / mean / scale are done as scalar glue in the wrapper."""
    c = pl.program_id(0)   # core-split axis (CORE_PARALLEL on v7x, size 1 elsewhere)
    i = pl.program_id(1)   # reduction axis ("arbitrary")

    @pl.when(i == 0)
    def _():
        out_ref[...] = jnp.zeros_like(out_ref)

    mu = mu_ref[...].astype(jnp.float32)
    sg = sigma_ref[...].astype(jnp.float32)
    s2 = sg * sg

    def fold(t):
        # VPU-only fold along the leading axis into acc_rows independent add chains.
        return t.reshape(tm // acc_rows, acc_rows, LANES).sum(axis=0)

    if not apply_mask:
        out_ref[...] += fold(mu * mu + s2 - jnp.log(s2))
    else:
        b = c * steps + i   # logical (unclamped) block index

        # Steady-state: fully-valid blocks take the short unmasked path.
        @pl.when(b < full_blocks)
        def _():
            out_ref[...] += fold(mu * mu + s2 - jnp.log(s2))

        # Tail / clamped duplicate blocks: mask out-of-range elements; clamp s2
        # before log so Pallas-padded garbage never produces NaN/-Inf inputs.
        @pl.when(b >= full_blocks)
        def _():
            row = jax.lax.broadcasted_iota(jnp.int32, (tm, LANES), 0)
            gr = b * tm + row                      # global row index
            full_rows = n_valid // LANES
            rem = n_valid % LANES
            mask = gr < full_rows
            if rem:
                col = jax.lax.broadcasted_iota(jnp.int32, (tm, LANES), 1)
                mask = mask | ((gr == full_rows) & (col < rem))
            s2_safe = jnp.where(mask, s2, 1.0)
            term = jnp.where(mask, mu * mu + s2 - jnp.log(s2_safe), 0.0)
            out_ref[...] += fold(term)


@jax.jit
def kl_divergence(mu, sigma, scale=1.0):
    assert mu.shape == sigma.shape, "mu and sigma must have the same shape"
    n_elems = mu.size

    # 16-bit dtypes pack 16 sublanes per vreg -> use a 16-row granule then.
    sub = 16 if jnp.dtype(mu.dtype).itemsize == 2 else 8

    rows_raw = pl.cdiv(n_elems, LANES)
    rows = max(rows_raw, sub)          # guarantee at least one full (sub, 128) tile
    padded_n = rows * LANES            # == n_elems for lane-aligned inputs (common case)

    def to_slab(x):
        flat = jnp.ravel(x)            # free for contiguous row-major inputs
        if padded_n != n_elems:        # rare small-copy fallback (non-multiple-of-128)
            flat = jnp.pad(flat, (0, padded_n - n_elems))
        return flat.reshape(rows, LANES)

    mu2d = to_slab(mu)
    sg2d = to_slab(sigma)

    # Row tile: multiple of `sub`, never larger than the slab, capped at TM_MAX.
    tm = min(TM_MAX, max(sub, (rows // sub) * sub))
    nblocks = pl.cdiv(rows, tm)

    # 2-way core split only where it actually shards (v7x, 2 TCs); else single TC.
    nc = 2 if (_is_v7x() and nblocks >= 2) else 1
    steps = pl.cdiv(nblocks, nc)

    # Widest accumulator tile (<=64 rows) that divides tm (tm is a multiple of 8).
    acc_rows = 64
    while tm % acc_rows:
        acc_rows //= 2

    # Mask only when the grid logically covers more elements than exist; only blocks
    # past `full_blocks` ever take the masked path.
    coverage = nc * steps * tm * LANES
    apply_mask = coverage != n_elems
    full_blocks = n_elems // (tm * LANES)

    kernel = functools.partial(
        _kl_kernel, n_valid=n_elems, tm=tm, steps=steps, acc_rows=acc_rows,
        full_blocks=full_blocks, apply_mask=apply_mask,
    )

    # Clamp the block index so every DMA reads an in-bounds block; logical positions
    # beyond the data are zeroed by the in-kernel tail mask.
    def in_idx(c, i):
        return (jnp.minimum(c * steps + i, nblocks - 1), 0)

    if nc > 1:
        dim_sem = (pltpu.CORE_PARALLEL, pltpu.ARBITRARY)
    else:
        dim_sem = ("arbitrary", "arbitrary")

    partials = pl.pallas_call(
        kernel,
        out_shape=jax.ShapeDtypeStruct((nc * acc_rows, LANES), jnp.float32),
        grid_spec=pltpu.PrefetchScalarGridSpec(
            num_scalar_prefetch=0,
            grid=(nc, steps),
            in_specs=[
                pl.BlockSpec((tm, LANES), in_idx),
                pl.BlockSpec((tm, LANES), in_idx),
            ],
            out_specs=pl.BlockSpec((acc_rows, LANES), lambda c, i: (c, 0)),
        ),
        compiler_params=pltpu.CompilerParams(
            dimension_semantics=dim_sem,
            vmem_limit_bytes=VMEM_LIMIT,
        ),
    )(mu2d, sg2d)

    # Final tiny reduction; the hoisted "-1" becomes a single subtraction of n_elems.
    total = jnp.sum(partials) - jnp.float32(n_elems)
    return 0.5 * (total / n_elems) * scale


if __name__ == "__main__":
    key = jax.random.PRNGKey(0)
    k_mu, k_sigma = jax.random.split(key)

    # Small NCHW-like latent maps (lane-aligned case).
    shape = (2, 4, 16, 16)
    mu = jax.random.normal(k_mu, shape, dtype=jnp.float32)
    # sigma strictly positive so log(sigma^2) is finite
    sigma = jax.nn.softplus(jax.random.normal(k_sigma, shape, dtype=jnp.float32)) + 0.1

    scale = 1.0
    out = kl_divergence(mu, sigma, scale)
    out = jax.block_until_ready(out)

    ref = 0.5 * jnp.mean(mu**2 + sigma**2 - jnp.log(sigma**2) - 1.0) * scale
    assert jnp.allclose(out, ref, rtol=1e-5, atol=1e-5), (out, ref)

    # Non-lane-aligned case exercises the gated tail-mask path.
    shape2 = (3, 5, 7)
    mu2 = jax.random.normal(k_mu, shape2, dtype=jnp.float32)
    sigma2 = jax.nn.softplus(jax.random.normal(k_sigma, shape2, dtype=jnp.float32)) + 0.1
    out2 = jax.block_until_ready(kl_divergence(mu2, sigma2, 0.5))
    ref2 = 0.5 * jnp.mean(mu2**2 + sigma2**2 - jnp.log(sigma2**2) - 1.0) * 0.5
    assert jnp.allclose(out2, ref2, rtol=1e-5, atol=1e-5), (out2, ref2)

    print("KERNEL_OK")
</pallas_src>

<mosaic_0001>
module attributes {stable_mosaic.version = 11 : i64} {
  func.func @_kl_kernel(%arg0: i32, %arg1: i32, %arg2: memref<16x128xf32, #tpu.memory_space<vmem>>, %arg3: memref<16x128xf32, #tpu.memory_space<vmem>>, %arg4: memref<16x128xf32, #tpu.memory_space<vmem>>) attributes {dimension_semantics = [#tpu.dimension_semantics<arbitrary>, #tpu.dimension_semantics<arbitrary>], iteration_bounds = array<i64: 1, 1>, scalar_prefetch = 0 : i64, scratch_operands = 0 : i64, tpu.core_type = #tpu.core_type<tc>, window_params = [{transform_indices = @transform_0, window_bounds = array<i64: 16, 128>}, {transform_indices = @transform_1, window_bounds = array<i64: 16, 128>}, {transform_indices = @transform_2, window_bounds = array<i64: 16, 128>}]} {
    %c0_i32 = arith.constant 0 : i32
    %0 = arith.cmpi eq, %arg1, %c0_i32 : i32
    %1 = arith.extui %0 : i1 to i32
    %c0_i32_0 = arith.constant 0 : i32
    %2 = arith.cmpi ne, %1, %c0_i32_0 : i32
    scf.if %2 {
      %cst_8 = arith.constant 0.000000e+00 : f32
      %15 = vector.broadcast %cst_8 : f32 to vector<16x128xf32>
      %c0_9 = arith.constant 0 : index
      %c0_10 = arith.constant 0 : index
      %16 = vector.load %arg4[%c0_9, %c0_10] : memref<16x128xf32, #tpu.memory_space<vmem>>, vector<16x128xf32>
      tpu.vector_store %arg4[%c0_9, %c0_10], %15 {strides = array<i32>} : memref<16x128xf32, #tpu.memory_space<vmem>>, vector<16x128xf32>,
    } else {
    }
    %c0 = arith.constant 0 : index
    %c0_1 = arith.constant 0 : index
    %3 = vector.load %arg2[%c0, %c0_1] : memref<16x128xf32, #tpu.memory_space<vmem>>, vector<16x128xf32>
    %c0_2 = arith.constant 0 : index
    %c0_3 = arith.constant 0 : index
    %4 = vector.load %arg3[%c0_2, %c0_3] : memref<16x128xf32, #tpu.memory_space<vmem>>, vector<16x128xf32>
    %5 = arith.mulf %4, %4 : vector<16x128xf32>
    %c0_4 = arith.constant 0 : index
    %c0_5 = arith.constant 0 : index
    %6 = vector.load %arg4[%c0_4, %c0_5] : memref<16x128xf32, #tpu.memory_space<vmem>>, vector<16x128xf32>
    %7 = arith.mulf %3, %3 : vector<16x128xf32>
    %8 = arith.addf %7, %5 : vector<16x128xf32>
    %9 = math.log %5 : vector<16x128xf32>
    %10 = arith.subf %8, %9 : vector<16x128xf32>
    %11 = vector.shape_cast %10 : vector<16x128xf32> to vector<1x16x128xf32>
    %cst = arith.constant dense<0.000000e+00> : vector<16x128xf32>
    %12 = vector.multi_reduction <add>, %11, %cst [0] : vector<1x16x128xf32> to vector<16x128xf32>
    %13 = arith.addf %6, %12 : vector<16x128xf32>
    %c0_6 = arith.constant 0 : index
    %c0_7 = arith.constant 0 : index
    %14 = vector.load %arg4[%c0_6, %c0_7] : memref<16x128xf32, #tpu.memory_space<vmem>>, vector<16x128xf32>
    tpu.vector_store %arg4[%c0_6, %c0_7], %13 {strides = array<i32>} : memref<16x128xf32, #tpu.memory_space<vmem>>, vector<16x128xf32>,
    return
  }
  func.func @transform_0(%arg0: i32, %arg1: i32) -> (i32, i32) {
    %c1_i32 = arith.constant 1 : i32
    %0 = arith.muli %arg0, %c1_i32 : i32
    %1 = arith.addi %0, %arg1 : i32
    %c0_i32 = arith.constant 0 : i32
    %2 = arith.minsi %1, %c0_i32 : i32
    %c0_i32_0 = arith.constant 0 : i32
    %c0_i32_1 = arith.constant 0 : i32
    return %2, %c0_i32_0 : i32, i32
  }
  func.func @transform_1(%arg0: i32, %arg1: i32) -> (i32, i32) {
    %c1_i32 = arith.constant 1 : i32
    %0 = arith.muli %arg0, %c1_i32 : i32
    %1 = arith.addi %0, %arg1 : i32
    %c0_i32 = arith.constant 0 : i32
    %2 = arith.minsi %1, %c0_i32 : i32
    %c0_i32_0 = arith.constant 0 : i32
    %c0_i32_1 = arith.constant 0 : i32
    return %2, %c0_i32_0 : i32, i32
  }
  func.func @transform_2(%arg0: i32, %arg1: i32) -> (i32, i32) {
    %c0_i32 = arith.constant 0 : i32
    %c0_i32_0 = arith.constant 0 : i32
    return %arg0, %c0_i32 : i32, i32
  }
}

</mosaic_0001>

<llo_original>
// kernel: kl_divergence.1
$region0: #{kl_divergence.1}
  #allocation0 [shape = 'u32[]', space=smem, size = 0x4, offset = 0x4, fixed_abs, tag = 'smem constant byte address 0x4 - core index']
  #allocation1 [shape = 'u32[144,128]{1,0:T(1,128)}', space=vmem, size = 0x12000, scoped, tag = 'internal scratch']
  %s0 = inlined_call_operand.vmem [shape: f32[16,128], index: 0, kind: input, shape index: {}]
  %s1 = inlined_call_operand.vmem [shape: f32[16,128], index: 1, kind: input, shape index: {}]
  %s2 = inlined_call_operand.vmem [shape: f32[16,128], index: 2, kind: output, shape index: {}]
  %s3 = sld [smem:[#allocation0]]
  $region22: #{kl_divergence.1} parent=0
    _
  %s5 = ssub.s32 1, %s3
  %s6 = scalar_select 0, %s5, %s3
  // Predicated region
  $region2: #{kl_divergence.1} parent=0 // pred_check
    _
  $region3: #{kl_divergence.1} parent=0 // pred_check_branch
    %8 = sbr.rel (0) target = $region5
  $region4: #{kl_divergence.1} parent=0 // pred_region
    %s9 = sadd.s32 0, 0
    %p10 = scmp.lt.s32.totalorder %s9, 0
    %s11 = scalar_select %p10, %s9, 0
    %s12 = smul.u32 2, %s11
    %p13 = scmp.lt.s32.totalorder %s12, 1
    %s14 = scalar_select %p13, %s12, 1
    %s15 = smul.addr %s14, 8
    %s16 = scalar_lea.vmem %s0, %s15
    %s17 = sadd.s32 0, 0
    %p18 = scmp.lt.s32.totalorder %s17, 0
    %s19 = scalar_select %p18, %s17, 0
    %s20 = smul.u32 2, %s19
  $region5: #{kl_divergence.1} parent=0 // pred_fallthru
    _
  // Predicated region
  $region6: #{kl_divergence.1} parent=0 // pred_check
    _
  $region7: #{kl_divergence.1} parent=0 // pred_check_branch
    %22 = sbr.rel (0) target = $region9
  $region8: #{kl_divergence.1} parent=0 // pred_region
    %s23 = sadd.s32 0, 0
    %p24 = scmp.lt.s32.totalorder %s23, 0
    %s25 = scalar_select %p24, %s23, 0
    %s26 = smul.u32 2, %s25
    %p27 = scmp.lt.s32.totalorder %s26, 1
    %s28 = scalar_select %p27, %s26, 1
    %s29 = smul.addr %s28, 8
    %s30 = scalar_lea.vmem %s1, %s29
    %s31 = sadd.s32 0, 0
    %p32 = scmp.lt.s32.totalorder %s31, 0
    %s33 = scalar_select %p32, %s31, 0
    %s34 = smul.u32 2, %s33
  $region9: #{kl_divergence.1} parent=0 // pred_fallthru
    _
  %s35 = sadd.s32 0, 0
  %p36 = scmp.lt.s32.totalorder %s35, 0
  %s37 = scalar_select %p36, %s35, 0
  %s38 = smul.u32 2, %s37
  %p39 = scmp.lt.s32.totalorder %s38, 1
  %s40 = scalar_select %p39, %s38, 1
  %s41 = smul.addr %s40, 8
  %s42 = scalar_lea.vmem %s0, %s41
  %s43 = sadd.s32 0, 0
  %p44 = scmp.lt.s32.totalorder %s43, 0
  %s45 = scalar_select %p44, %s43, 0
  %s46 = smul.u32 2, %s45
  %p47 = scmp.lt.s32.totalorder %s46, 1
  %s48 = scalar_select %p47, %s46, 1
  %s49 = smul.addr %s48, 8
  %s50 = scalar_lea.vmem %s1, %s49
  %s51 = sadd.s32 0, 0
  %p52 = scmp.lt.s32.totalorder %s51, 0
  %s53 = scalar_select %p52, %s51, 0
  %s54 = smul.u32 2, %s53
  %p55 = scmp.lt.s32.totalorder %s54, 1
  %s56 = scalar_select %p55, %s54, 1
  %s57 = smul.addr %s56, 8
  %s58 = scalar_lea.vmem %s0, %s57
  %s59 = sadd.s32 0, 0
  %p60 = scmp.lt.s32.totalorder %s59, 0
  %s61 = scalar_select %p60, %s59, 0
  %s62 = smul.u32 2, %s61
  %s63 = sadd.s32 0, 0
  %p64 = scmp.lt.s32.totalorder %s63, 0
  %s65 = scalar_select %p64, %s63, 0
  %s66 = smul.u32 2, %s65
  %p67 = scmp.lt.s32.totalorder %s66, 1
  %s68 = scalar_select %p67, %s66, 1
  %s69 = smul.addr %s68, 8
  %s70 = scalar_lea.vmem %s1, %s69
  %s71 = sadd.s32 0, 0
  %p72 = scmp.lt.s32.totalorder %s71, 0
  %s73 = scalar_select %p72, %s71, 0
  %s74 = smul.u32 2, %s73
  %p75 = scmp.eq.s32.totalorder 0, 0
  // Predicated region
  $region10: #{kl_divergence.1} parent=0 // pred_check
    %p76 = pneg %p75
  $region11: #{kl_divergence.1} parent=0 // pred_check_branch
    %78 = sbr.rel (%p76) target = $region13
  $region12: #{kl_divergence.1} parent=0 // pred_region
    %79 = vst [vmem:[%s2] sm:$0xff] 0.0
    %80 = vst [vmem:[%s2 + $0x8] sm:$0xff] 0.0
  $region13: #{kl_divergence.1} parent=0 // pred_fallthru
    _
  %v81 = vld [vmem:[%s58] sm:$0xff]
  %v82 = vld [vmem:[%s58 + $0x8] sm:$0xff]
  %v83 = vld [vmem:[%s70] sm:$0xff]
  %v84 = vld [vmem:[%s70 + $0x8] sm:$0xff]
  %v85 = vmul.f32 %v83, %v83
  %v86 = vmul.f32 %v84, %v84
  %v87 = vld [vmem:[%s2] sm:$0xff]
  %v88 = vld [vmem:[%s2 + $0x8] sm:$0xff]
  %v89 = vmul.f32 %v81, %v81
  %v90 = vmul.f32 %v82, %v82
  %v91 = vadd.f32 %v89, %v85
  %v92 = vadd.f32 %v90, %v86
  %v93 = vlog2.pop %v85
  %v94 = vmul.f32 %v93, 0.6931472
  %v95 = vlog2.pop %v86
  %v96 = vmul.f32 %v95, 0.6931472
  %v97 = vsub.f32 %v91, %v94
  %v98 = vsub.f32 %v92, %v96
  %v99 = vadd.f32 %v97, 0.0
  %v100 = vadd.f32 %v98, 0.0
  %v101 = vadd.f32 %v87, %v99
  %v102 = vadd.f32 %v88, %v100
  %103 = vst [vmem:[%s2] sm:$0xff] %v101
  %104 = vst [vmem:[%s2 + $0x8] sm:$0xff] %v102
  // Predicated region
  $region14: #{kl_divergence.1} parent=0 // pred_check
    _
  $region15: #{kl_divergence.1} parent=0 // pred_check_branch
    %106 = sbr.rel (0) target = $region17
  $region16: #{kl_divergence.1} parent=0 // pred_region
    _
  $region17: #{kl_divergence.1} parent=0 // pred_fallthru
    _
  // Predicated region
  $region18: #{kl_divergence.1} parent=0 // pred_check
    _
  $region19: #{kl_divergence.1} parent=0 // pred_check_branch
    %108 = sbr.rel (0) target = $region21
  $region20: #{kl_divergence.1} parent=0 // pred_region
    _
  $region21: #{kl_divergence.1} parent=0 // pred_fallthru
    _

</llo_original>
